<compile_context>
chip_gen: v7x
topology: tpu7x:2x2x1
jax: 0.10.0
libtpu: 0.0.40
codegen_flags: <defaults>
</compile_context>

<pallas_src>
import jax
import jax.numpy as jnp
from jax.experimental import pallas as pl
from jax.experimental.pallas import tpu as pltpu


def _abs_kernel(x_ref, o_ref):
    o_ref[...] = jnp.abs(x_ref[...])


def _min_sublanes(dtype) -> int:
    bits = jnp.dtype(dtype).itemsize * 8
    if bits >= 32:
        return 8
    if bits == 16:
        return 16
    return 32  # int8 / fp8


def abs_pallas(x: jax.Array, *, target_block_bytes: int = 4 * 1024 * 1024) -> jax.Array:
    """Elementwise absolute value via a Pallas TPU kernel (any shape / dtype)."""
    orig_shape = x.shape
    dtype = x.dtype
    n = x.size
    if n == 0:
        return x

    itemsize = jnp.dtype(dtype).itemsize
    min_rows = _min_sublanes(dtype)

    # --- choose a lane-dense 2D slab ----------------------------------------
    lanes = None
    for c in (1024, 512, 256, 128):
        if n % c == 0:
            lanes = c
            break

    if lanes is not None:
        # Fast path: pure reshape (metadata only), no extra HBM traffic.
        slab = x.reshape(n // lanes, lanes)
        padded = False
    else:
        # Rare slow path: minimal pad to a multiple of 128 lanes.
        lanes = 128
        pad = (-n) % lanes
        slab = jnp.pad(x.reshape(-1), (0, pad)).reshape(-1, lanes)
        padded = True

    rows = slab.shape[0]

    # --- block sizing: ~target_block_bytes per buffer ------------------------
    block_rows = max(min_rows, target_block_bytes // (lanes * itemsize))
    block_rows = (block_rows // min_rows) * min_rows
    if rows <= block_rows:
        # Single block equal to the full array dims (always a legal block shape).
        block_rows = rows
        grid = (1,)
    else:
        # Partial last block is masked by Pallas; no row padding needed.
        grid = (pl.cdiv(rows, block_rows),)

    out = pl.pallas_call(
        _abs_kernel,
        out_shape=jax.ShapeDtypeStruct((rows, lanes), dtype),
        grid_spec=pl.GridSpec(
            grid=grid,
            in_specs=[pl.BlockSpec((block_rows, lanes), lambda i: (i, 0))],
            out_specs=pl.BlockSpec((block_rows, lanes), lambda i: (i, 0)),
        ),
        compiler_params=pltpu.CompilerParams(
            dimension_semantics=("parallel",),
            vmem_limit_bytes=32 * 1024 * 1024,
        ),
    )(slab)

    if padded:
        return out.reshape(-1)[:n].reshape(orig_shape)
    return out.reshape(orig_shape)


if __name__ == "__main__":
    key = jax.random.PRNGKey(0)

    # Small NCHW input, consistent with a conv-style activation use.
    x = jax.random.normal(key, (2, 4, 16, 16), dtype=jnp.float32)
    y = jax.block_until_ready(abs_pallas(x))
    assert y.shape == x.shape and y.dtype == x.dtype
    assert jnp.allclose(y, jnp.abs(x)), "mismatch vs jnp.abs reference (f32)"

    # bf16 path (exercises the 16-sublane floor).
    xb = jax.random.normal(jax.random.PRNGKey(1), (2, 4, 16, 16)).astype(jnp.bfloat16)
    yb = jax.block_until_ready(abs_pallas(xb))
    assert yb.dtype == jnp.bfloat16
    assert jnp.all(yb == jnp.abs(xb)), "mismatch vs jnp.abs reference (bf16)"

    # Odd size not divisible by 128 (exercises the padded fallback).
    xo = jax.random.normal(jax.random.PRNGKey(2), (3, 5, 7), dtype=jnp.float32)
    yo = jax.block_until_ready(abs_pallas(xo))
    assert yo.shape == xo.shape
    assert jnp.allclose(yo, jnp.abs(xo)), "mismatch vs jnp.abs reference (odd)"

    # Larger tensor (exercises the multi-block pipelined path).
    xl = jax.random.normal(jax.random.PRNGKey(3), (8, 64, 64, 64), dtype=jnp.float32)
    yl = jax.block_until_ready(abs_pallas(xl))
    assert jnp.allclose(yl, jnp.abs(xl)), "mismatch vs jnp.abs reference (large)"

    print("KERNEL_OK")
</pallas_src>

<mosaic_0001>
module attributes {stable_mosaic.version = 11 : i64} {
  func.func @_abs_kernel(%arg0: i32, %arg1: memref<2x1024xf32, #tpu.memory_space<vmem>>, %arg2: memref<2x1024xf32, #tpu.memory_space<vmem>>) attributes {dimension_semantics = [#tpu.dimension_semantics<parallel>], iteration_bounds = array<i64: 1>, scalar_prefetch = 0 : i64, scratch_operands = 0 : i64, tpu.core_type = #tpu.core_type<tc>, window_params = [{transform_indices = @transform_0, window_bounds = array<i64: 2, 1024>}, {transform_indices = @transform_1, window_bounds = array<i64: 2, 1024>}]} {
    %c0 = arith.constant 0 : index
    %c0_0 = arith.constant 0 : index
    %0 = vector.load %arg1[%c0, %c0_0] : memref<2x1024xf32, #tpu.memory_space<vmem>>, vector<2x1024xf32>
    %1 = math.absf %0 : vector<2x1024xf32>
    %c0_1 = arith.constant 0 : index
    %c0_2 = arith.constant 0 : index
    %2 = vector.load %arg2[%c0_1, %c0_2] : memref<2x1024xf32, #tpu.memory_space<vmem>>, vector<2x1024xf32>
    tpu.vector_store %arg2[%c0_1, %c0_2], %1 {strides = array<i32>} : memref<2x1024xf32, #tpu.memory_space<vmem>>, vector<2x1024xf32>,
    return
  }
  func.func @transform_0(%arg0: i32) -> (i32, i32) {
    %c0_i32 = arith.constant 0 : i32
    %c0_i32_0 = arith.constant 0 : i32
    return %arg0, %c0_i32 : i32, i32
  }
  func.func @transform_1(%arg0: i32) -> (i32, i32) {
    %c0_i32 = arith.constant 0 : i32
    %c0_i32_0 = arith.constant 0 : i32
    return %arg0, %c0_i32 : i32, i32
  }
}

</mosaic_0001>

<llo_original>
// kernel: tpu_custom_call.1
$region0: #{tpu_custom_call.1}
  #allocation0 [shape = 'u32[]', space=smem, size = 0x4, offset = 0x4, fixed_abs, tag = 'smem constant byte address 0x4 - core index']
  #allocation1 [shape = 'u32[144,128]{1,0:T(1,128)}', space=vmem, size = 0x12000, scoped, tag = 'internal scratch']
  %s0 = inlined_call_operand.hbm [shape: f32[2,1024], index: 0, kind: input, shape index: {}]
  %s1 = inlined_call_operand.hbm [shape: f32[2,1024], index: 1, kind: output, shape index: {}]
  %s2 = sld [smem:[#allocation0]]
  $region18: #{tpu_custom_call.1} parent=0
    _
  %s4 = ssub.s32 1, %s2
  %s5 = scalar_select 0, %s4, %s2
  $region1: #{tpu_custom_call.1} parent=0
    #allocation2 [shape = 'u8[8192]{0}', space=vmem, size = 0x2000, scoped, tag = 'input window, operand 0, single buffered']
    #allocation3 [shape = 's32[1]{0}', space=sflag, size = 0x4, scoped, tag = 'scoped memory for tpu_custom_call.1']
    #allocation4 [shape = 's32[1]{0}', space=sflag, size = 0x4, scoped, tag = 'scoped memory for tpu_custom_call.1']
    #allocation5 [shape = 'u8[8192]{0}', space=vmem, size = 0x2000, scoped, tag = 'output window, operand 0, single buffered']
    %6 = vsyncpa [#allocation3], 0
    %7 = vsyncpa [#allocation4], 0
    // Predicated region
    $region2: #{tpu_custom_call.1} parent=1 // pred_check
      _
    $region3: #{tpu_custom_call.1} parent=1 // pred_check_branch
      %9 = sbr.rel (0) target = $region5
    $region4: #{tpu_custom_call.1} parent=1 // pred_region
      %s11 = ssub.s32 256, 256
      %12 = vsyncadd [#allocation3], %s11
      %s14 = sshll.u32 [#allocation2], 4
      %s15 = int_to_ptr.vmem [resolvable:$true] %s14
      %17 = dma.hbm_to_vmem [thread:$0]  %s0, 256, %s15, [#allocation3]
    $region5: #{tpu_custom_call.1} parent=1 // pred_fallthru
      _
    // Predicated region
    $region6: #{tpu_custom_call.1} parent=1 // pred_check
      _
    $region7: #{tpu_custom_call.1} parent=1 // pred_check_branch
      %19 = sbr.rel (0) target = $region9
    $region8: #{tpu_custom_call.1} parent=1 // pred_region
      %20 = dma.done [#allocation3], 256
    $region9: #{tpu_custom_call.1} parent=1 // pred_fallthru
      _
    %v21 = vld [vmem:[#allocation2] sm:$0xff]
    %v22 = vld [vmem:[#allocation2 + $0x8] sm:$0xff]
    %v23 = vand.u32 2147483647, %v21
    %v24 = vand.u32 2147483647, %v22
    %25 = vst [vmem:[#allocation5] sm:$0xff] %v23
    %26 = vst [vmem:[#allocation5 + $0x8] sm:$0xff] %v24
    // Predicated region
    $region10: #{tpu_custom_call.1} parent=1 // pred_check
      _
    $region11: #{tpu_custom_call.1} parent=1 // pred_check_branch
      %28 = sbr.rel (0) target = $region13
    $region12: #{tpu_custom_call.1} parent=1 // pred_region
      %s30 = ssub.s32 256, 256
      %31 = vsyncadd [#allocation4], %s30
      %s33 = sshll.u32 [#allocation5], 4
      %s34 = int_to_ptr.vmem [resolvable:$true] %s33
      %36 = dma.vmem_to_hbm [thread:$0]  %s34, 256, %s1, [#allocation4]
    $region13: #{tpu_custom_call.1} parent=1 // pred_fallthru
      _
    // Predicated region
    $region14: #{tpu_custom_call.1} parent=1 // pred_check
      _
    $region15: #{tpu_custom_call.1} parent=1 // pred_check_branch
      %38 = sbr.rel (0) target = $region17
    $region16: #{tpu_custom_call.1} parent=1 // pred_region
      %39 = dma.done [#allocation4], 256
    $region17: #{tpu_custom_call.1} parent=1 // pred_fallthru
      _
    %40 = vsyncpa [#allocation3], 1
    %41 = vsyncpa [#allocation4], 1

</llo_original>
